<compile_context>
chip_gen: v7x
topology: tpu7x:2x2x1
jax: 0.10.0
libtpu: 0.0.40
codegen_flags: <defaults>
</compile_context>

<pallas_src>
import math

import jax
import jax.numpy as jnp
from jax.experimental import pallas as pl
from jax.experimental.pallas import tpu as pltpu  # noqa: F401  (TPU backend)

LANES = 128                          # vreg lane width: slab cols & padded dims
VEC_ROWS = 8                         # 4 vector rows padded to a sublane tile
ROWS_PER_LAYER = 2 * LANES + VEC_ROWS  # w_mu(128) + w_sigma(128) + vecs(8)


# ----------------------------------------------------------------------------
# Parameter slab packing (host side)
# ----------------------------------------------------------------------------
def _pad2(a, rows, cols=LANES):
    return jnp.pad(a, ((0, rows - a.shape[0]), (0, cols - a.shape[1])))


def pack_params(layers):
    """Pack all NoisyLinear params into one (n_layers*264, 128) f32 slab.

    Per-layer block (row offsets relative to base = i * ROWS_PER_LAYER):
      [0,128)    w_mu      (in_f x out_f, zero-padded to 128x128)
      [128,256)  w_sigma
      256        b_mu      (1 x out_f, padded to 128 lanes)
      257        b_sigma
      258        eps_out
      259        eps_in
      [260,264)  zero padding (sublane alignment)
    """
    n = len(layers)
    slab = jnp.zeros((n * ROWS_PER_LAYER, LANES), jnp.float32)
    for i, lp in enumerate(layers):
        base = i * ROWS_PER_LAYER
        slab = slab.at[base:base + LANES].set(_pad2(lp["w_mu"], LANES))
        slab = slab.at[base + LANES:base + 2 * LANES].set(
            _pad2(lp["w_sigma"], LANES))
        vb = base + 2 * LANES
        slab = slab.at[vb + 0].set(_pad2(lp["b_mu"], 1)[0])
        slab = slab.at[vb + 1].set(_pad2(lp["b_sigma"], 1)[0])
        slab = slab.at[vb + 2].set(_pad2(lp["eps_out"][None, :], 1)[0])
        slab = slab.at[vb + 3].set(_pad2(lp["eps_in"][None, :], 1)[0])
    return slab


# ----------------------------------------------------------------------------
# Kernel
# ----------------------------------------------------------------------------
def make_noisy_dqn_kernel(n_layers):
    def kernel(x_ref, p_ref, out_ref):
        h = x_ref[...]                                   # (B, 128), lane-dense
        for idx in range(n_layers):
            base = idx * ROWS_PER_LAYER
            w_mu = p_ref[base:base + LANES, :]           # (128, 128)
            w_sigma = p_ref[base + LANES:base + 2 * LANES, :]
            vb = base + 2 * LANES
            b_mu = p_ref[vb + 0:vb + 1, :]               # (1, 128)
            b_sigma = p_ref[vb + 1:vb + 2, :]
            eps_out = p_ref[vb + 2:vb + 3, :]
            eps_in = p_ref[vb + 3:vb + 4, :]

            # x @ (w_mu + w_sigma ∘ (eps_in ⊗ eps_out))
            #   = x @ w_mu + ((x ∘ eps_in) @ w_sigma) ∘ eps_out
            mean = jnp.dot(h, w_mu, preferred_element_type=jnp.float32)
            noise = jnp.dot(h * eps_in, w_sigma,
                            preferred_element_type=jnp.float32) * eps_out
            h = mean + noise + b_mu + b_sigma * eps_out
            if idx != n_layers - 1:
                h = jnp.maximum(h, 0.0)                  # ReLU
        out_ref[...] = h.astype(out_ref.dtype)           # padded lanes are 0

    return kernel


def noisy_dqn_forward(x, slab, *, action_space, n_layers=3):
    """x: (B, input_dim) f32, slab: packed params -> (B, action_space) f32."""
    B, d = x.shape
    assert d <= LANES, "input_dim must fit in one lane tile for this kernel"
    x_pad = x if d == LANES else jnp.pad(x, ((0, 0), (0, LANES - d)))
    out = pl.pallas_call(
        make_noisy_dqn_kernel(n_layers),
        out_shape=jax.ShapeDtypeStruct((B, LANES), jnp.float32),
    )(x_pad, slab)
    return out[:, :action_space]


# ----------------------------------------------------------------------------
# NoisyLinear init (factorized Gaussian noise, matches torch NoisyLinear)
# ----------------------------------------------------------------------------
def _scale_noise(key, n):
    x = jax.random.normal(key, (n,), dtype=jnp.float32)
    return jnp.sign(x) * jnp.sqrt(jnp.abs(x))


def init_noisy_linear(key, in_f, out_f, sigma_init=0.5):
    """Weights stored transposed (in_f, out_f); noise kept factorized."""
    k_wmu, k_bmu, k_ein, k_eout = jax.random.split(key, 4)
    mu_range = 1.0 / math.sqrt(in_f)
    w_mu = jax.random.uniform(k_wmu, (in_f, out_f), jnp.float32,
                              -mu_range, mu_range)
    w_sigma = jnp.full((in_f, out_f), sigma_init / math.sqrt(in_f),
                       jnp.float32)
    b_mu = jax.random.uniform(k_bmu, (1, out_f), jnp.float32,
                              -mu_range, mu_range)
    b_sigma = jnp.full((1, out_f), sigma_init / math.sqrt(out_f), jnp.float32)
    eps_in = _scale_noise(k_ein, in_f)     # (in_f,)
    eps_out = _scale_noise(k_eout, out_f)  # (out_f,)  (also the bias epsilon)
    return dict(w_mu=w_mu, w_sigma=w_sigma, b_mu=b_mu, b_sigma=b_sigma,
                eps_in=eps_in, eps_out=eps_out)


def reference_forward(x, layers):
    """Pure-JAX reference using the dense composition (as torch does)."""
    h = x
    n = len(layers)
    for i, lp in enumerate(layers):
        w_eps = lp["eps_in"][:, None] * lp["eps_out"][None, :]
        w = lp["w_mu"] + lp["w_sigma"] * w_eps
        b = lp["b_mu"] + lp["b_sigma"] * lp["eps_out"][None, :]
        h = h @ w + b
        if i < n - 1:
            h = jnp.maximum(h, 0.0)
    return h


# ----------------------------------------------------------------------------
if __name__ == "__main__":
    input_dim = 32      # args.input_dim
    hidden = 16
    action_space = 4
    batch = 8           # sublane-aligned; use >=128 in real use to amortize

    key = jax.random.PRNGKey(0)
    k_x, k1, k2, k3 = jax.random.split(key, 4)
    x = jax.random.normal(k_x, (batch, input_dim), dtype=jnp.float32)
    layers = [init_noisy_linear(k1, input_dim, hidden),
              init_noisy_linear(k2, hidden, hidden),
              init_noisy_linear(k3, hidden, action_space)]

    # NOTE: reset_noise() is a host-side re-pack (draw new eps rows, rebuild
    # the slab); the forward kernel itself is unchanged.
    slab = pack_params(layers)

    out = noisy_dqn_forward(x, slab, action_space=action_space,
                            n_layers=len(layers))
    out = jax.block_until_ready(out)

    ref = reference_forward(x, layers)
    assert out.shape == (batch, action_space)
    assert jnp.allclose(out, ref, atol=1e-4, rtol=1e-4), \
        float(jnp.max(jnp.abs(out - ref)))
    print("KERNEL_OK")
</pallas_src>

<mosaic_0001>
module attributes {stable_mosaic.version = 11 : i64} {
  func.func @kernel(%arg0: memref<8x128xf32, #tpu.memory_space<vmem>>, %arg1: memref<792x128xf32, #tpu.memory_space<vmem>>, %arg2: memref<8x128xf32, #tpu.memory_space<vmem>>) attributes {dimension_semantics = [], scalar_prefetch = 0 : i64, scratch_operands = 0 : i64, tpu.core_type = #tpu.core_type<tc>} {
    %c0 = arith.constant 0 : index
    %c0_0 = arith.constant 0 : index
    %0 = vector.load %arg0[%c0, %c0_0] : memref<8x128xf32, #tpu.memory_space<vmem>>, vector<8x128xf32>
    %c0_1 = arith.constant 0 : index
    %c0_2 = arith.constant 0 : index
    %1 = vector.load %arg1[%c0_1, %c0_2] : memref<792x128xf32, #tpu.memory_space<vmem>>, vector<128x128xf32>
    %c128 = arith.constant 128 : index
    %c0_3 = arith.constant 0 : index
    %2 = vector.load %arg1[%c128, %c0_3] : memref<792x128xf32, #tpu.memory_space<vmem>>, vector<128x128xf32>
    %c256 = arith.constant 256 : index
    %c0_4 = arith.constant 0 : index
    %3 = vector.load %arg1[%c256, %c0_4] : memref<792x128xf32, #tpu.memory_space<vmem>>, vector<1x128xf32>
    %c257 = arith.constant 257 : index
    %c0_5 = arith.constant 0 : index
    %4 = vector.load %arg1[%c257, %c0_5] : memref<792x128xf32, #tpu.memory_space<vmem>>, vector<1x128xf32>
    %c258 = arith.constant 258 : index
    %c0_6 = arith.constant 0 : index
    %5 = vector.load %arg1[%c258, %c0_6] : memref<792x128xf32, #tpu.memory_space<vmem>>, vector<1x128xf32>
    %c259 = arith.constant 259 : index
    %c0_7 = arith.constant 0 : index
    %6 = vector.load %arg1[%c259, %c0_7] : memref<792x128xf32, #tpu.memory_space<vmem>>, vector<1x128xf32>
    %cst = arith.constant dense<0.000000e+00> : vector<8x128xf32>
    %7 = tpu.matmul %0, %1, %cst {dimension_numbers = #tpu.dot_dimension_numbers<[1], [0], [0], [1], [0, 0, 1, 1], [], []>} : vector<8x128xf32>, vector<128x128xf32>, vector<8x128xf32> -> vector<8x128xf32>
    %8 = vector.broadcast %6 : vector<1x128xf32> to vector<8x128xf32>
    %9 = arith.mulf %0, %8 : vector<8x128xf32>
    %cst_8 = arith.constant dense<0.000000e+00> : vector<8x128xf32>
    %10 = tpu.matmul %9, %2, %cst_8 {dimension_numbers = #tpu.dot_dimension_numbers<[1], [0], [0], [1], [0, 0, 1, 1], [], []>} : vector<8x128xf32>, vector<128x128xf32>, vector<8x128xf32> -> vector<8x128xf32>
    %11 = vector.broadcast %5 : vector<1x128xf32> to vector<8x128xf32>
    %12 = arith.mulf %10, %11 : vector<8x128xf32>
    %13 = arith.addf %7, %12 : vector<8x128xf32>
    %14 = vector.broadcast %3 : vector<1x128xf32> to vector<8x128xf32>
    %15 = arith.addf %13, %14 : vector<8x128xf32>
    %16 = arith.mulf %4, %5 : vector<1x128xf32>
    %17 = vector.broadcast %16 : vector<1x128xf32> to vector<8x128xf32>
    %18 = arith.addf %15, %17 : vector<8x128xf32>
    %cst_9 = arith.constant 0.000000e+00 : f32
    %19 = vector.broadcast %cst_9 : f32 to vector<8x128xf32>
    %20 = arith.maximumf %18, %19 : vector<8x128xf32>
    %c264 = arith.constant 264 : index
    %c0_10 = arith.constant 0 : index
    %21 = vector.load %arg1[%c264, %c0_10] : memref<792x128xf32, #tpu.memory_space<vmem>>, vector<128x128xf32>
    %c392 = arith.constant 392 : index
    %c0_11 = arith.constant 0 : index
    %22 = vector.load %arg1[%c392, %c0_11] : memref<792x128xf32, #tpu.memory_space<vmem>>, vector<128x128xf32>
    %c520 = arith.constant 520 : index
    %c0_12 = arith.constant 0 : index
    %23 = vector.load %arg1[%c520, %c0_12] : memref<792x128xf32, #tpu.memory_space<vmem>>, vector<1x128xf32>
    %c521 = arith.constant 521 : index
    %c0_13 = arith.constant 0 : index
    %24 = vector.load %arg1[%c521, %c0_13] : memref<792x128xf32, #tpu.memory_space<vmem>>, vector<1x128xf32>
    %c522 = arith.constant 522 : index
    %c0_14 = arith.constant 0 : index
    %25 = vector.load %arg1[%c522, %c0_14] : memref<792x128xf32, #tpu.memory_space<vmem>>, vector<1x128xf32>
    %c523 = arith.constant 523 : index
    %c0_15 = arith.constant 0 : index
    %26 = vector.load %arg1[%c523, %c0_15] : memref<792x128xf32, #tpu.memory_space<vmem>>, vector<1x128xf32>
    %cst_16 = arith.constant dense<0.000000e+00> : vector<8x128xf32>
    %27 = tpu.matmul %20, %21, %cst_16 {dimension_numbers = #tpu.dot_dimension_numbers<[1], [0], [0], [1], [0, 0, 1, 1], [], []>} : vector<8x128xf32>, vector<128x128xf32>, vector<8x128xf32> -> vector<8x128xf32>
    %28 = vector.broadcast %26 : vector<1x128xf32> to vector<8x128xf32>
    %29 = arith.mulf %20, %28 : vector<8x128xf32>
    %cst_17 = arith.constant dense<0.000000e+00> : vector<8x128xf32>
    %30 = tpu.matmul %29, %22, %cst_17 {dimension_numbers = #tpu.dot_dimension_numbers<[1], [0], [0], [1], [0, 0, 1, 1], [], []>} : vector<8x128xf32>, vector<128x128xf32>, vector<8x128xf32> -> vector<8x128xf32>
    %31 = vector.broadcast %25 : vector<1x128xf32> to vector<8x128xf32>
    %32 = arith.mulf %30, %31 : vector<8x128xf32>
    %33 = arith.addf %27, %32 : vector<8x128xf32>
    %34 = vector.broadcast %23 : vector<1x128xf32> to vector<8x128xf32>
    %35 = arith.addf %33, %34 : vector<8x128xf32>
    %36 = arith.mulf %24, %25 : vector<1x128xf32>
    %37 = vector.broadcast %36 : vector<1x128xf32> to vector<8x128xf32>
    %38 = arith.addf %35, %37 : vector<8x128xf32>
    %cst_18 = arith.constant 0.000000e+00 : f32
    %39 = vector.broadcast %cst_18 : f32 to vector<8x128xf32>
    %40 = arith.maximumf %38, %39 : vector<8x128xf32>
    %c528 = arith.constant 528 : index
    %c0_19 = arith.constant 0 : index
    %41 = vector.load %arg1[%c528, %c0_19] : memref<792x128xf32, #tpu.memory_space<vmem>>, vector<128x128xf32>
    %c656 = arith.constant 656 : index
    %c0_20 = arith.constant 0 : index
    %42 = vector.load %arg1[%c656, %c0_20] : memref<792x128xf32, #tpu.memory_space<vmem>>, vector<128x128xf32>
    %c784 = arith.constant 784 : index
    %c0_21 = arith.constant 0 : index
    %43 = vector.load %arg1[%c784, %c0_21] : memref<792x128xf32, #tpu.memory_space<vmem>>, vector<1x128xf32>
    %c785 = arith.constant 785 : index
    %c0_22 = arith.constant 0 : index
    %44 = vector.load %arg1[%c785, %c0_22] : memref<792x128xf32, #tpu.memory_space<vmem>>, vector<1x128xf32>
    %c786 = arith.constant 786 : index
    %c0_23 = arith.constant 0 : index
    %45 = vector.load %arg1[%c786, %c0_23] : memref<792x128xf32, #tpu.memory_space<vmem>>, vector<1x128xf32>
    %c787 = arith.constant 787 : index
    %c0_24 = arith.constant 0 : index
    %46 = vector.load %arg1[%c787, %c0_24] : memref<792x128xf32, #tpu.memory_space<vmem>>, vector<1x128xf32>
    %cst_25 = arith.constant dense<0.000000e+00> : vector<8x128xf32>
    %47 = tpu.matmul %40, %41, %cst_25 {dimension_numbers = #tpu.dot_dimension_numbers<[1], [0], [0], [1], [0, 0, 1, 1], [], []>} : vector<8x128xf32>, vector<128x128xf32>, vector<8x128xf32> -> vector<8x128xf32>
    %48 = vector.broadcast %46 : vector<1x128xf32> to vector<8x128xf32>
    %49 = arith.mulf %40, %48 : vector<8x128xf32>
    %cst_26 = arith.constant dense<0.000000e+00> : vector<8x128xf32>
    %50 = tpu.matmul %49, %42, %cst_26 {dimension_numbers = #tpu.dot_dimension_numbers<[1], [0], [0], [1], [0, 0, 1, 1], [], []>} : vector<8x128xf32>, vector<128x128xf32>, vector<8x128xf32> -> vector<8x128xf32>
    %51 = vector.broadcast %45 : vector<1x128xf32> to vector<8x128xf32>
    %52 = arith.mulf %50, %51 : vector<8x128xf32>
    %53 = arith.addf %47, %52 : vector<8x128xf32>
    %54 = vector.broadcast %43 : vector<1x128xf32> to vector<8x128xf32>
    %55 = arith.addf %53, %54 : vector<8x128xf32>
    %56 = arith.mulf %44, %45 : vector<1x128xf32>
    %57 = vector.broadcast %56 : vector<1x128xf32> to vector<8x128xf32>
    %58 = arith.addf %55, %57 : vector<8x128xf32>
    %c0_27 = arith.constant 0 : index
    %c0_28 = arith.constant 0 : index
    %59 = vector.load %arg2[%c0_27, %c0_28] : memref<8x128xf32, #tpu.memory_space<vmem>>, vector<8x128xf32>
    tpu.vector_store %arg2[%c0_27, %c0_28], %58 {strides = array<i32>} : memref<8x128xf32, #tpu.memory_space<vmem>>, vector<8x128xf32>,
    return
  }
}

</mosaic_0001>

<llo_original>
// kernel: tpu_custom_call.1
$region0: #{tpu_custom_call.1}
  #allocation0 [shape = 'u32[]', space=smem, size = 0x4, offset = 0x4, fixed_abs, tag = 'smem constant byte address 0x4 - core index']
  #allocation1 [shape = 'u32[144,128]{1,0:T(1,128)}', space=vmem, size = 0x12000, scoped, tag = 'internal scratch']
  %s0 = inlined_call_operand.hbm [shape: f32[8,128], index: 0, kind: input, shape index: {}]
  %s1 = inlined_call_operand.hbm [shape: f32[792,128], index: 1, kind: input, shape index: {}]
  %s2 = inlined_call_operand.hbm [shape: f32[8,128], index: 2, kind: output, shape index: {}]
  %s3 = sld [smem:[#allocation0]]
  $region26: #{tpu_custom_call.1} parent=0
    _
  %s5 = ssub.s32 1, %s3
  %s6 = scalar_select 0, %s5, %s3
  $region1: #{tpu_custom_call.1} parent=0
    #allocation2 [shape = 'u8[4096]{0}', space=vmem, size = 0x1000, scoped, tag = 'input window, operand 0, single buffered']
    #allocation3 [shape = 's32[1]{0}', space=sflag, size = 0x4, scoped, tag = 'scoped memory for tpu_custom_call.1']
    #allocation4 [shape = 's32[1]{0}', space=sflag, size = 0x4, scoped, tag = 'scoped memory for tpu_custom_call.1']
    #allocation5 [shape = 'u8[405504]{0}', space=vmem, size = 0x63000, scoped, tag = 'input window, operand 1, single buffered']
    #allocation6 [shape = 's32[1]{0}', space=sflag, size = 0x4, scoped, tag = 'scoped memory for tpu_custom_call.1']
    #allocation7 [shape = 'u8[4096]{0}', space=vmem, size = 0x1000, scoped, tag = 'output window, operand 0, single buffered']
    %7 = vsyncpa [#allocation3], 0
    %8 = vsyncpa [#allocation6], 0
    %9 = vsyncpa [#allocation4], 0
    // Predicated region
    $region2: #{tpu_custom_call.1} parent=1 // pred_check
      _
    $region3: #{tpu_custom_call.1} parent=1 // pred_check_branch
      %11 = sbr.rel (0) target = $region5
    $region4: #{tpu_custom_call.1} parent=1 // pred_region
      %s13 = ssub.s32 128, 128
      %14 = vsyncadd [#allocation3], %s13
      %s16 = sshll.u32 [#allocation2], 4
      %s17 = int_to_ptr.vmem [resolvable:$true] %s16
      %19 = dma.hbm_to_vmem [thread:$0]  %s0, 128, %s17, [#allocation3]
    $region5: #{tpu_custom_call.1} parent=1 // pred_fallthru
      _
    // Predicated region
    $region6: #{tpu_custom_call.1} parent=1 // pred_check
      _
    $region7: #{tpu_custom_call.1} parent=1 // pred_check_branch
      %21 = sbr.rel (0) target = $region9
    $region8: #{tpu_custom_call.1} parent=1 // pred_region
      %s23 = ssub.s32 12672, 12672
      %24 = vsyncadd [#allocation6], %s23
      %s25 = sshll.u32 [#allocation5], 4
      %s26 = int_to_ptr.vmem [resolvable:$true] %s25
      %31 = dma.hbm_to_vmem [thread:$0]  %s1, 12672, %s26, [#allocation6], 128, 128, 8
    $region9: #{tpu_custom_call.1} parent=1 // pred_fallthru
      _
    // Predicated region
    $region10: #{tpu_custom_call.1} parent=1 // pred_check
      _
    $region11: #{tpu_custom_call.1} parent=1 // pred_check_branch
      %33 = sbr.rel (0) target = $region13
    $region12: #{tpu_custom_call.1} parent=1 // pred_region
      %34 = dma.done [#allocation3], 128
    $region13: #{tpu_custom_call.1} parent=1 // pred_fallthru
      _
    // Predicated region
    $region14: #{tpu_custom_call.1} parent=1 // pred_check
      _
    $region15: #{tpu_custom_call.1} parent=1 // pred_check_branch
      %36 = sbr.rel (0) target = $region17
    $region16: #{tpu_custom_call.1} parent=1 // pred_region
      %37 = dma.done [#allocation6], 12672
    $region17: #{tpu_custom_call.1} parent=1 // pred_fallthru
      _
    %v38 = vld [vmem:[#allocation2] sm:$0xff]
    %v39 = vld [vmem:[#allocation5] sm:$0xff]
    %v40 = vld [vmem:[#allocation5 + $0x8] sm:$0xff]
    %v41 = vld [vmem:[#allocation5 + $0x10] sm:$0xff]
    %v42 = vld [vmem:[#allocation5 + $0x18] sm:$0xff]
    %v43 = vld [vmem:[#allocation5 + $0x20] sm:$0xff]
    %v44 = vld [vmem:[#allocation5 + $0x28] sm:$0xff]
    %v45 = vld [vmem:[#allocation5 + $0x30] sm:$0xff]
    %v46 = vld [vmem:[#allocation5 + $0x38] sm:$0xff]
    %v47 = vld [vmem:[#allocation5 + $0x40] sm:$0xff]
    %v48 = vld [vmem:[#allocation5 + $0x48] sm:$0xff]
    %v49 = vld [vmem:[#allocation5 + $0x50] sm:$0xff]
    %v50 = vld [vmem:[#allocation5 + $0x58] sm:$0xff]
    %v51 = vld [vmem:[#allocation5 + $0x60] sm:$0xff]
    %v52 = vld [vmem:[#allocation5 + $0x68] sm:$0xff]
    %v53 = vld [vmem:[#allocation5 + $0x70] sm:$0xff]
    %v54 = vld [vmem:[#allocation5 + $0x78] sm:$0xff]
    %v55 = vld [vmem:[#allocation5 + $0x80] sm:$0xff]
    %v56 = vld [vmem:[#allocation5 + $0x88] sm:$0xff]
    %v57 = vld [vmem:[#allocation5 + $0x90] sm:$0xff]
    %v58 = vld [vmem:[#allocation5 + $0x98] sm:$0xff]
    %v59 = vld [vmem:[#allocation5 + $0xa0] sm:$0xff]
    %v60 = vld [vmem:[#allocation5 + $0xa8] sm:$0xff]
    %v61 = vld [vmem:[#allocation5 + $0xb0] sm:$0xff]
    %v62 = vld [vmem:[#allocation5 + $0xb8] sm:$0xff]
    %v63 = vld [vmem:[#allocation5 + $0xc0] sm:$0xff]
    %v64 = vld [vmem:[#allocation5 + $0xc8] sm:$0xff]
    %v65 = vld [vmem:[#allocation5 + $0xd0] sm:$0xff]
    %v66 = vld [vmem:[#allocation5 + $0xd8] sm:$0xff]
    %v67 = vld [vmem:[#allocation5 + $0xe0] sm:$0xff]
    %v68 = vld [vmem:[#allocation5 + $0xe8] sm:$0xff]
    %v69 = vld [vmem:[#allocation5 + $0xf0] sm:$0xff]
    %v70 = vld [vmem:[#allocation5 + $0xf8] sm:$0xff]
    %v71 = vld [vmem:[#allocation5 + $0x100] sm:$0x1]
    %v72 = vld [vmem:[#allocation5 + $0x101] sm:$0x1]
    %v73 = vld [vmem:[#allocation5 + $0x102] sm:$0x1]
    %v74 = vld [vmem:[#allocation5 + $0x103] sm:$0x1]
    %v75 = vlaneseq
    %v76 = vshrl.u32 %v75, 7
    %v77 = vsub.s32 0, %v76
    %v78 = vrot.slane %v74, %v77
    %v79 = vmul.f32 %v38, %v78
    %80 = vmatprep.subr.mxu0 0.0
    %81 = vmatpush1.msra.mxu0 %v55
    %82 = vmatprep.subr.mxu0 0.0
    %83 = vmatpush1.msra.mxu0 %v56
    %84 = vmatprep.subr.mxu0 0.0
    %85 = vmatpush1.msra.mxu0 %v57
    %86 = vmatprep.subr.mxu0 0.0
    %87 = vmatpush1.msra.mxu0 %v58
    %88 = vmatprep.subr.mxu0 0.0
    %89 = vmatpush1.msra.mxu0 %v59
    %90 = vmatprep.subr.mxu0 0.0
    %91 = vmatpush1.msra.mxu0 %v60
    %92 = vmatprep.subr.mxu0 0.0
    %93 = vmatpush1.msra.mxu0 %v61
    %94 = vmatprep.subr.mxu0 0.0
    %95 = vmatpush1.msra.mxu0 %v62
    %96 = vmatprep.subr.mxu0 0.0
    %97 = vmatpush1.msra.mxu0 %v63
    %98 = vmatprep.subr.mxu0 0.0
    %99 = vmatpush1.msra.mxu0 %v64
    %100 = vmatprep.subr.mxu0 0.0
    %101 = vmatpush1.msra.mxu0 %v65
    %102 = vmatprep.subr.mxu0 0.0
    %103 = vmatpush1.msra.mxu0 %v66
    %104 = vmatprep.subr.mxu0 0.0
    %105 = vmatpush1.msra.mxu0 %v67
    %106 = vmatprep.subr.mxu0 0.0
    %107 = vmatpush1.msra.mxu0 %v68
    %108 = vmatprep.subr.mxu0 0.0
    %109 = vmatpush1.msra.mxu0 %v69
    %110 = vmatprep.subr.mxu0 0.0
    %111 = vmatpush1.msra.mxu0 %v70
    %112 = vmatprep.subr.mxu0 0.0
    %113 = vmatpush1.msra.mxu0 0.0
    %114 = vmatprep.subr.mxu0 0.0
    %115 = vmatpush1.msra.mxu0 0.0
    %116 = vmatprep.subr.mxu0 0.0
    %117 = vmatpush1.msra.mxu0 0.0
    %118 = vmatprep.subr.mxu0 0.0
    %119 = vmatpush1.msra.mxu0 0.0
    %120 = vmatprep.subr.mxu0 0.0
    %121 = vmatpush1.msra.mxu0 0.0
    %122 = vmatprep.subr.mxu0 0.0
    %123 = vmatpush1.msra.mxu0 0.0
    %124 = vmatprep.subr.mxu0 0.0
    %125 = vmatpush1.msra.mxu0 0.0
    %126 = vmatprep.subr.mxu0 0.0
    %127 = vmatpush1.msra.mxu0 0.0
    %128 = vmatprep.subr.mxu0 0.0
    %129 = vmatpush1.msra.mxu0 0.0
    %130 = vmatprep.subr.mxu0 0.0
    %131 = vmatpush1.msra.mxu0 0.0
    %132 = vmatprep.subr.mxu0 0.0
    %133 = vmatpush1.msra.mxu0 0.0
    %134 = vmatprep.subr.mxu0 0.0
    %135 = vmatpush1.msra.mxu0 0.0
    %136 = vmatprep.subr.mxu0 0.0
    %137 = vmatpush1.msra.mxu0 0.0
    %138 = vmatprep.subr.mxu0 0.0
    %139 = vmatpush1.msra.mxu0 0.0
    %140 = vmatprep.subr.mxu0 0.0
    %141 = vmatpush1.msra.mxu0 0.0
    %142 = vmatprep.subr.mxu0 0.0
    %143 = vmatpush1.msra.mxu0 0.0
    %144 = vmatprep.mubr.f32.mxu0 0.0
    %145 = vmatmul.mubr.f32.gmra.mrb[0].mxu0 %v79
    %v146 = vpop.f32.mrb[0].mxu0
    %v147 = vadd.f32 0.0, %v146
    %v148 = vpop.f32.mrb[0].mxu0
    %149 = vdwg.mxu0
    %v150 = vlaneseq
    %v151 = vshrl.u32 %v150, 7
    %v152 = vsub.s32 0, %v151
    %v153 = vrot.slane %v73, %v152
    %v154 = vmul.f32 %v147, %v153
    %155 = vmatprep.subr.mxu0 0.0
    %156 = vmatpush1.msra.mxu0 %v39
    %157 = vmatprep.subr.mxu0 0.0
    %158 = vmatpush1.msra.mxu0 %v40
    %159 = vmatprep.subr.mxu0 0.0
    %160 = vmatpush1.msra.mxu0 %v41
    %161 = vmatprep.subr.mxu0 0.0
    %162 = vmatpush1.msra.mxu0 %v42
    %163 = vmatprep.subr.mxu0 0.0
    %164 = vmatpush1.msra.mxu0 %v43
    %165 = vmatprep.subr.mxu0 0.0
    %166 = vmatpush1.msra.mxu0 %v44
    %167 = vmatprep.subr.mxu0 0.0
    %168 = vmatpush1.msra.mxu0 %v45
    %169 = vmatprep.subr.mxu0 0.0
    %170 = vmatpush1.msra.mxu0 %v46
    %171 = vmatprep.subr.mxu0 0.0
    %172 = vmatpush1.msra.mxu0 %v47
    %173 = vmatprep.subr.mxu0 0.0
    %174 = vmatpush1.msra.mxu0 %v48
    %175 = vmatprep.subr.mxu0 0.0
    %176 = vmatpush1.msra.mxu0 %v49
    %177 = vmatprep.subr.mxu0 0.0
    %178 = vmatpush1.msra.mxu0 %v50
    %179 = vmatprep.subr.mxu0 0.0
    %180 = vmatpush1.msra.mxu0 %v51
    %181 = vmatprep.subr.mxu0 0.0
    %182 = vmatpush1.msra.mxu0 %v52
    %183 = vmatprep.subr.mxu0 0.0
    %184 = vmatpush1.msra.mxu0 %v53
    %185 = vmatprep.subr.mxu0 0.0
    %186 = vmatpush1.msra.mxu0 %v54
    %187 = vmatprep.subr.mxu0 0.0
    %188 = vmatpush1.msra.mxu0 0.0
    %189 = vmatprep.subr.mxu0 0.0
    %190 = vmatpush1.msra.mxu0 0.0
    %191 = vmatprep.subr.mxu0 0.0
    %192 = vmatpush1.msra.mxu0 0.0
    %193 = vmatprep.subr.mxu0 0.0
    %194 = vmatpush1.msra.mxu0 0.0
    %195 = vmatprep.subr.mxu0 0.0
    %196 = vmatpush1.msra.mxu0 0.0
    %197 = vmatprep.subr.mxu0 0.0
    %198 = vmatpush1.msra.mxu0 0.0
    %199 = vmatprep.subr.mxu0 0.0
    %200 = vmatpush1.msra.mxu0 0.0
    %201 = vmatprep.subr.mxu0 0.0
    %202 = vmatpush1.msra.mxu0 0.0
    %203 = vmatprep.subr.mxu0 0.0
    %204 = vmatpush1.msra.mxu0 0.0
    %205 = vmatprep.subr.mxu0 0.0
    %206 = vmatpush1.msra.mxu0 0.0
    %207 = vmatprep.subr.mxu0 0.0
    %208 = vmatpush1.msra.mxu0 0.0
    %209 = vmatprep.subr.mxu0 0.0
    %210 = vmatpush1.msra.mxu0 0.0
    %211 = vmatprep.subr.mxu0 0.0
    %212 = vmatpush1.msra.mxu0 0.0
    %213 = vmatprep.subr.mxu0 0.0
    %214 = vmatpush1.msra.mxu0 0.0
    %215 = vmatprep.subr.mxu0 0.0
    %216 = vmatpush1.msra.mxu0 0.0
    %217 = vmatprep.subr.mxu0 0.0
    %218 = vmatpush1.msra.mxu0 0.0
    %219 = vmatprep.mubr.f32.mxu0 0.0
    %220 = vmatmul.mubr.f32.gmra.mrb[0].mxu0 %v38
    %v221 = vpop.f32.mrb[0].mxu0
    %v222 = vadd.f32 %v154, %v221
    %v223 = vpop.f32.mrb[0].mxu0
    %224 = vdwg.mxu0
    %v225 = vlaneseq
    %v226 = vshrl.u32 %v225, 7
    %v227 = vsub.s32 0, %v226
    %v228 = vrot.slane %v71, %v227
    %v229 = vadd.f32 %v222, %v228
    %v230 = vmul.f32 %v72, %v73
    %v231 = vlaneseq
    %v232 = vshrl.u32 %v231, 7
    %v233 = vsub.s32 0, %v232
    %v234 = vrot.slane %v230, %v233
    %v235 = vadd.f32 %v229, %v234
    %v236 = vmax.f32 %v235, 0.0
    %v237 = vld [vmem:[#allocation5 + $0x108] sm:$0xff]
    %v238 = vld [vmem:[#allocation5 + $0x110] sm:$0xff]
    %v239 = vld [vmem:[#allocation5 + $0x118] sm:$0xff]
    %v240 = vld [vmem:[#allocation5 + $0x120] sm:$0xff]
    %v241 = vld [vmem:[#allocation5 + $0x128] sm:$0xff]
    %v242 = vld [vmem:[#allocation5 + $0x130] sm:$0xff]
    %v243 = vld [vmem:[#allocation5 + $0x138] sm:$0xff]
    %v244 = vld [vmem:[#allocation5 + $0x140] sm:$0xff]
    %v245 = vld [vmem:[#allocation5 + $0x148] sm:$0xff]
    %v246 = vld [vmem:[#allocation5 + $0x150] sm:$0xff]
    %v247 = vld [vmem:[#allocation5 + $0x158] sm:$0xff]
    %v248 = vld [vmem:[#allocation5 + $0x160] sm:$0xff]
    %v249 = vld [vmem:[#allocation5 + $0x168] sm:$0xff]
    %v250 = vld [vmem:[#allocation5 + $0x170] sm:$0xff]
    %v251 = vld [vmem:[#allocation5 + $0x178] sm:$0xff]
    %v252 = vld [vmem:[#allocation5 + $0x180] sm:$0xff]
    %v253 = vld [vmem:[#allocation5 + $0x188] sm:$0xff]
    %v254 = vld [vmem:[#allocation5 + $0x190] sm:$0xff]
    %v255 = vld [vmem:[#allocation5 + $0x198] sm:$0xff]
    %v256 = vld [vmem:[#allocation5 + $0x1a0] sm:$0xff]
    %v257 = vld [vmem:[#allocation5 + $0x1a8] sm:$0xff]
    %v258 = vld [vmem:[#allocation5 + $0x1b0] sm:$0xff]
    %v259 = vld [vmem:[#allocation5 + $0x1b8] sm:$0xff]
    %v260 = vld [vmem:[#allocation5 + $0x1c0] sm:$0xff]
    %v261 = vld [vmem:[#allocation5 + $0x1c8] sm:$0xff]
    %v262 = vld [vmem:[#allocation5 + $0x1d0] sm:$0xff]
    %v263 = vld [vmem:[#allocation5 + $0x1d8] sm:$0xff]
    %v264 = vld [vmem:[#allocation5 + $0x1e0] sm:$0xff]
    %v265 = vld [vmem:[#allocation5 + $0x1e8] sm:$0xff]
    %v266 = vld [vmem:[#allocation5 + $0x1f0] sm:$0xff]
    %v267 = vld [vmem:[#allocation5 + $0x1f8] sm:$0xff]
    %v268 = vld [vmem:[#allocation5 + $0x200] sm:$0xff]
    %v269 = vld [vmem:[#allocation5 + $0x208] sm:$0x1]
    %v270 = vld [vmem:[#allocation5 + $0x209] sm:$0x1]
    %v271 = vld [vmem:[#allocation5 + $0x20a] sm:$0x1]
    %v272 = vld [vmem:[#allocation5 + $0x20b] sm:$0x1]
    %v273 = vlaneseq
    %v274 = vshrl.u32 %v273, 7
    %v275 = vsub.s32 0, %v274
    %v276 = vrot.slane %v272, %v275
    %v277 = vmul.f32 %v236, %v276
    %278 = vmatprep.subr.mxu0 0.0
    %279 = vmatpush1.msra.mxu0 %v253
    %280 = vmatprep.subr.mxu0 0.0
    %281 = vmatpush1.msra.mxu0 %v254
    %282 = vmatprep.subr.mxu0 0.0
    %283 = vmatpush1.msra.mxu0 %v255
    %284 = vmatprep.subr.mxu0 0.0
    %285 = vmatpush1.msra.mxu0 %v256
    %286 = vmatprep.subr.mxu0 0.0
    %287 = vmatpush1.msra.mxu0 %v257
    %288 = vmatprep.subr.mxu0 0.0
    %289 = vmatpush1.msra.mxu0 %v258
    %290 = vmatprep.subr.mxu0 0.0
    %291 = vmatpush1.msra.mxu0 %v259
    %292 = vmatprep.subr.mxu0 0.0
    %293 = vmatpush1.msra.mxu0 %v260
    %294 = vmatprep.subr.mxu0 0.0
    %295 = vmatpush1.msra.mxu0 %v261
    %296 = vmatprep.subr.mxu0 0.0
    %297 = vmatpush1.msra.mxu0 %v262
    %298 = vmatprep.subr.mxu0 0.0
    %299 = vmatpush1.msra.mxu0 %v263
    %300 = vmatprep.subr.mxu0 0.0
    %301 = vmatpush1.msra.mxu0 %v264
    %302 = vmatprep.subr.mxu0 0.0
    %303 = vmatpush1.msra.mxu0 %v265
    %304 = vmatprep.subr.mxu0 0.0
    %305 = vmatpush1.msra.mxu0 %v266
    %306 = vmatprep.subr.mxu0 0.0
    %307 = vmatpush1.msra.mxu0 %v267
    %308 = vmatprep.subr.mxu0 0.0
    %309 = vmatpush1.msra.mxu0 %v268
    %310 = vmatprep.subr.mxu0 0.0
    %311 = vmatpush1.msra.mxu0 0.0
    %312 = vmatprep.subr.mxu0 0.0
    %313 = vmatpush1.msra.mxu0 0.0
    %314 = vmatprep.subr.mxu0 0.0
    %315 = vmatpush1.msra.mxu0 0.0
    %316 = vmatprep.subr.mxu0 0.0
    %317 = vmatpush1.msra.mxu0 0.0
    %318 = vmatprep.subr.mxu0 0.0
    %319 = vmatpush1.msra.mxu0 0.0
    %320 = vmatprep.subr.mxu0 0.0
    %321 = vmatpush1.msra.mxu0 0.0
    %322 = vmatprep.subr.mxu0 0.0
    %323 = vmatpush1.msra.mxu0 0.0
    %324 = vmatprep.subr.mxu0 0.0
    %325 = vmatpush1.msra.mxu0 0.0
    %326 = vmatprep.subr.mxu0 0.0
    %327 = vmatpush1.msra.mxu0 0.0
    %328 = vmatprep.subr.mxu0 0.0
    %329 = vmatpush1.msra.mxu0 0.0
    %330 = vmatprep.subr.mxu0 0.0
    %331 = vmatpush1.msra.mxu0 0.0
    %332 = vmatprep.subr.mxu0 0.0
    %333 = vmatpush1.msra.mxu0 0.0
    %334 = vmatprep.subr.mxu0 0.0
    %335 = vmatpush1.msra.mxu0 0.0
    %336 = vmatprep.subr.mxu0 0.0
    %337 = vmatpush1.msra.mxu0 0.0
    %338 = vmatprep.subr.mxu0 0.0
    %339 = vmatpush1.msra.mxu0 0.0
    %340 = vmatprep.subr.mxu0 0.0
    %341 = vmatpush1.msra.mxu0 0.0
    %342 = vmatprep.mubr.f32.mxu0 0.0
    %343 = vmatmul.mubr.f32.gmra.mrb[0].mxu0 %v277
    %v344 = vpop.f32.mrb[0].mxu0
    %v345 = vadd.f32 0.0, %v344
    %v346 = vpop.f32.mrb[0].mxu0
    %347 = vdwg.mxu0
    %v348 = vlaneseq
    %v349 = vshrl.u32 %v348, 7
    %v350 = vsub.s32 0, %v349
    %v351 = vrot.slane %v271, %v350
    %v352 = vmul.f32 %v345, %v351
    %353 = vmatprep.subr.mxu0 0.0
    %354 = vmatpush1.msra.mxu0 %v237
    %355 = vmatprep.subr.mxu0 0.0
    %356 = vmatpush1.msra.mxu0 %v238
    %357 = vmatprep.subr.mxu0 0.0
    %358 = vmatpush1.msra.mxu0 %v239
    %359 = vmatprep.subr.mxu0 0.0
    %360 = vmatpush1.msra.mxu0 %v240
    %361 = vmatprep.subr.mxu0 0.0
    %362 = vmatpush1.msra.mxu0 %v241
    %363 = vmatprep.subr.mxu0 0.0
    %364 = vmatpush1.msra.mxu0 %v242
    %365 = vmatprep.subr.mxu0 0.0
    %366 = vmatpush1.msra.mxu0 %v243
    %367 = vmatprep.subr.mxu0 0.0
    %368 = vmatpush1.msra.mxu0 %v244
    %369 = vmatprep.subr.mxu0 0.0
    %370 = vmatpush1.msra.mxu0 %v245
    %371 = vmatprep.subr.mxu0 0.0
    %372 = vmatpush1.msra.mxu0 %v246
    %373 = vmatprep.subr.mxu0 0.0
    %374 = vmatpush1.msra.mxu0 %v247
    %375 = vmatprep.subr.mxu0 0.0
    %376 = vmatpush1.msra.mxu0 %v248
    %377 = vmatprep.subr.mxu0 0.0
    %378 = vmatpush1.msra.mxu0 %v249
    %379 = vmatprep.subr.mxu0 0.0
    %380 = vmatpush1.msra.mxu0 %v250
    %381 = vmatprep.subr.mxu0 0.0
    %382 = vmatpush1.msra.mxu0 %v251
    %383 = vmatprep.subr.mxu0 0.0
    %384 = vmatpush1.msra.mxu0 %v252
    %385 = vmatprep.subr.mxu0 0.0
    %386 = vmatpush1.msra.mxu0 0.0
    %387 = vmatprep.subr.mxu0 0.0
    %388 = vmatpush1.msra.mxu0 0.0
    %389 = vmatprep.subr.mxu0 0.0
    %390 = vmatpush1.msra.mxu0 0.0
    %391 = vmatprep.subr.mxu0 0.0
    %392 = vmatpush1.msra.mxu0 0.0
    %393 = vmatprep.subr.mxu0 0.0
    %394 = vmatpush1.msra.mxu0 0.0
    %395 = vmatprep.subr.mxu0 0.0
    %396 = vmatpush1.msra.mxu0 0.0
    %397 = vmatprep.subr.mxu0 0.0
    %398 = vmatpush1.msra.mxu0 0.0
    %399 = vmatprep.subr.mxu0 0.0
    %400 = vmatpush1.msra.mxu0 0.0
    %401 = vmatprep.subr.mxu0 0.0
    %402 = vmatpush1.msra.mxu0 0.0
    %403 = vmatprep.subr.mxu0 0.0
    %404 = vmatpush1.msra.mxu0 0.0
    %405 = vmatprep.subr.mxu0 0.0
    %406 = vmatpush1.msra.mxu0 0.0
    %407 = vmatprep.subr.mxu0 0.0
    %408 = vmatpush1.msra.mxu0 0.0
    %409 = vmatprep.subr.mxu0 0.0
    %410 = vmatpush1.msra.mxu0 0.0
    %411 = vmatprep.subr.mxu0 0.0
    %412 = vmatpush1.msra.mxu0 0.0
    %413 = vmatprep.subr.mxu0 0.0
    %414 = vmatpush1.msra.mxu0 0.0
    %415 = vmatprep.subr.mxu0 0.0
    %416 = vmatpush1.msra.mxu0 0.0
    %417 = vmatprep.mubr.f32.mxu0 0.0
    %418 = vmatmul.mubr.f32.gmra.mrb[0].mxu0 %v236
    %v419 = vpop.f32.mrb[0].mxu0
    %v420 = vadd.f32 %v352, %v419
    %v421 = vpop.f32.mrb[0].mxu0
    %422 = vdwg.mxu0
    %v423 = vlaneseq
    %v424 = vshrl.u32 %v423, 7
    %v425 = vsub.s32 0, %v424
    %v426 = vrot.slane %v269, %v425
    %v427 = vadd.f32 %v420, %v426
    %v428 = vmul.f32 %v270, %v271
    %v429 = vlaneseq
    %v430 = vshrl.u32 %v429, 7
    %v431 = vsub.s32 0, %v430
    %v432 = vrot.slane %v428, %v431
    %v433 = vadd.f32 %v427, %v432
    %v434 = vmax.f32 %v433, 0.0
    %v435 = vld [vmem:[#allocation5 + $0x210] sm:$0xff]
    %v436 = vld [vmem:[#allocation5 + $0x218] sm:$0xff]
    %v437 = vld [vmem:[#allocation5 + $0x220] sm:$0xff]
    %v438 = vld [vmem:[#allocation5 + $0x228] sm:$0xff]
    %v439 = vld [vmem:[#allocation5 + $0x230] sm:$0xff]
    %v440 = vld [vmem:[#allocation5 + $0x238] sm:$0xff]
    %v441 = vld [vmem:[#allocation5 + $0x240] sm:$0xff]
    %v442 = vld [vmem:[#allocation5 + $0x248] sm:$0xff]
    %v443 = vld [vmem:[#allocation5 + $0x250] sm:$0xff]
    %v444 = vld [vmem:[#allocation5 + $0x258] sm:$0xff]
    %v445 = vld [vmem:[#allocation5 + $0x260] sm:$0xff]
    %v446 = vld [vmem:[#allocation5 + $0x268] sm:$0xff]
    %v447 = vld [vmem:[#allocation5 + $0x270] sm:$0xff]
    %v448 = vld [vmem:[#allocation5 + $0x278] sm:$0xff]
    %v449 = vld [vmem:[#allocation5 + $0x280] sm:$0xff]
    %v450 = vld [vmem:[#allocation5 + $0x288] sm:$0xff]
    %v451 = vld [vmem:[#allocation5 + $0x290] sm:$0xff]
    %v452 = vld [vmem:[#allocation5 + $0x298] sm:$0xff]
    %v453 = vld [vmem:[#allocation5 + $0x2a0] sm:$0xff]
    %v454 = vld [vmem:[#allocation5 + $0x2a8] sm:$0xff]
    %v455 = vld [vmem:[#allocation5 + $0x2b0] sm:$0xff]
    %v456 = vld [vmem:[#allocation5 + $0x2b8] sm:$0xff]
    %v457 = vld [vmem:[#allocation5 + $0x2c0] sm:$0xff]
    %v458 = vld [vmem:[#allocation5 + $0x2c8] sm:$0xff]
    %v459 = vld [vmem:[#allocation5 + $0x2d0] sm:$0xff]
    %v460 = vld [vmem:[#allocation5 + $0x2d8] sm:$0xff]
    %v461 = vld [vmem:[#allocation5 + $0x2e0] sm:$0xff]
    %v462 = vld [vmem:[#allocation5 + $0x2e8] sm:$0xff]
    %v463 = vld [vmem:[#allocation5 + $0x2f0] sm:$0xff]
    %v464 = vld [vmem:[#allocation5 + $0x2f8] sm:$0xff]
    %v465 = vld [vmem:[#allocation5 + $0x300] sm:$0xff]
    %v466 = vld [vmem:[#allocation5 + $0x308] sm:$0xff]
    %v467 = vld [vmem:[#allocation5 + $0x310] sm:$0x1]
    %v468 = vld [vmem:[#allocation5 + $0x311] sm:$0x1]
    %v469 = vld [vmem:[#allocation5 + $0x312] sm:$0x1]
    %v470 = vld [vmem:[#allocation5 + $0x313] sm:$0x1]
    %v471 = vlaneseq
    %v472 = vshrl.u32 %v471, 7
    %v473 = vsub.s32 0, %v472
    %v474 = vrot.slane %v470, %v473
    %v475 = vmul.f32 %v434, %v474
    %476 = vmatprep.subr.mxu0 0.0
    %477 = vmatpush1.msra.mxu0 %v451
    %478 = vmatprep.subr.mxu0 0.0
    %479 = vmatpush1.msra.mxu0 %v452
    %480 = vmatprep.subr.mxu0 0.0
    %481 = vmatpush1.msra.mxu0 %v453
    %482 = vmatprep.subr.mxu0 0.0
    %483 = vmatpush1.msra.mxu0 %v454
    %484 = vmatprep.subr.mxu0 0.0
    %485 = vmatpush1.msra.mxu0 %v455
    %486 = vmatprep.subr.mxu0 0.0
    %487 = vmatpush1.msra.mxu0 %v456
    %488 = vmatprep.subr.mxu0 0.0
    %489 = vmatpush1.msra.mxu0 %v457
    %490 = vmatprep.subr.mxu0 0.0
    %491 = vmatpush1.msra.mxu0 %v458
    %492 = vmatprep.subr.mxu0 0.0
    %493 = vmatpush1.msra.mxu0 %v459
    %494 = vmatprep.subr.mxu0 0.0
    %495 = vmatpush1.msra.mxu0 %v460
    %496 = vmatprep.subr.mxu0 0.0
    %497 = vmatpush1.msra.mxu0 %v461
    %498 = vmatprep.subr.mxu0 0.0
    %499 = vmatpush1.msra.mxu0 %v462
    %500 = vmatprep.subr.mxu0 0.0
    %501 = vmatpush1.msra.mxu0 %v463
    %502 = vmatprep.subr.mxu0 0.0
    %503 = vmatpush1.msra.mxu0 %v464
    %504 = vmatprep.subr.mxu0 0.0
    %505 = vmatpush1.msra.mxu0 %v465
    %506 = vmatprep.subr.mxu0 0.0
    %507 = vmatpush1.msra.mxu0 %v466
    %508 = vmatprep.subr.mxu0 0.0
    %509 = vmatpush1.msra.mxu0 0.0
    %510 = vmatprep.subr.mxu0 0.0
    %511 = vmatpush1.msra.mxu0 0.0
    %512 = vmatprep.subr.mxu0 0.0
    %513 = vmatpush1.msra.mxu0 0.0
    %514 = vmatprep.subr.mxu0 0.0
    %515 = vmatpush1.msra.mxu0 0.0
    %516 = vmatprep.subr.mxu0 0.0
    %517 = vmatpush1.msra.mxu0 0.0
    %518 = vmatprep.subr.mxu0 0.0
    %519 = vmatpush1.msra.mxu0 0.0
    %520 = vmatprep.subr.mxu0 0.0
    %521 = vmatpush1.msra.mxu0 0.0
    %522 = vmatprep.subr.mxu0 0.0
    %523 = vmatpush1.msra.mxu0 0.0
    %524 = vmatprep.subr.mxu0 0.0
    %525 = vmatpush1.msra.mxu0 0.0
    %526 = vmatprep.subr.mxu0 0.0
    %527 = vmatpush1.msra.mxu0 0.0
    %528 = vmatprep.subr.mxu0 0.0
    %529 = vmatpush1.msra.mxu0 0.0
    %530 = vmatprep.subr.mxu0 0.0
    %531 = vmatpush1.msra.mxu0 0.0
    %532 = vmatprep.subr.mxu0 0.0
    %533 = vmatpush1.msra.mxu0 0.0
    %534 = vmatprep.subr.mxu0 0.0
    %535 = vmatpush1.msra.mxu0 0.0
    %536 = vmatprep.subr.mxu0 0.0
    %537 = vmatpush1.msra.mxu0 0.0
    %538 = vmatprep.subr.mxu0 0.0
    %539 = vmatpush1.msra.mxu0 0.0
    %540 = vmatprep.mubr.f32.mxu0 0.0
    %541 = vmatmul.mubr.f32.gmra.mrb[0].mxu0 %v475
    %v542 = vpop.f32.mrb[0].mxu0
    %v543 = vadd.f32 0.0, %v542
    %v544 = vpop.f32.mrb[0].mxu0
    %545 = vdwg.mxu0
    %v546 = vlaneseq
    %v547 = vshrl.u32 %v546, 7
    %v548 = vsub.s32 0, %v547
    %v549 = vrot.slane %v469, %v548
    %v550 = vmul.f32 %v543, %v549
    %551 = vmatprep.subr.mxu0 0.0
    %552 = vmatpush1.msra.mxu0 %v435
    %553 = vmatprep.subr.mxu0 0.0
    %554 = vmatpush1.msra.mxu0 %v436
    %555 = vmatprep.subr.mxu0 0.0
    %556 = vmatpush1.msra.mxu0 %v437
    %557 = vmatprep.subr.mxu0 0.0
    %558 = vmatpush1.msra.mxu0 %v438
    %559 = vmatprep.subr.mxu0 0.0
    %560 = vmatpush1.msra.mxu0 %v439
    %561 = vmatprep.subr.mxu0 0.0
    %562 = vmatpush1.msra.mxu0 %v440
    %563 = vmatprep.subr.mxu0 0.0
    %564 = vmatpush1.msra.mxu0 %v441
    %565 = vmatprep.subr.mxu0 0.0
    %566 = vmatpush1.msra.mxu0 %v442
    %567 = vmatprep.subr.mxu0 0.0
    %568 = vmatpush1.msra.mxu0 %v443
    %569 = vmatprep.subr.mxu0 0.0
    %570 = vmatpush1.msra.mxu0 %v444
    %571 = vmatprep.subr.mxu0 0.0
    %572 = vmatpush1.msra.mxu0 %v445
    %573 = vmatprep.subr.mxu0 0.0
    %574 = vmatpush1.msra.mxu0 %v446
    %575 = vmatprep.subr.mxu0 0.0
    %576 = vmatpush1.msra.mxu0 %v447
    %577 = vmatprep.subr.mxu0 0.0
    %578 = vmatpush1.msra.mxu0 %v448
    %579 = vmatprep.subr.mxu0 0.0
    %580 = vmatpush1.msra.mxu0 %v449
    %581 = vmatprep.subr.mxu0 0.0
    %582 = vmatpush1.msra.mxu0 %v450
    %583 = vmatprep.subr.mxu0 0.0
    %584 = vmatpush1.msra.mxu0 0.0
    %585 = vmatprep.subr.mxu0 0.0
    %586 = vmatpush1.msra.mxu0 0.0
    %587 = vmatprep.subr.mxu0 0.0
    %588 = vmatpush1.msra.mxu0 0.0
    %589 = vmatprep.subr.mxu0 0.0
    %590 = vmatpush1.msra.mxu0 0.0
    %591 = vmatprep.subr.mxu0 0.0
    %592 = vmatpush1.msra.mxu0 0.0
    %593 = vmatprep.subr.mxu0 0.0
    %594 = vmatpush1.msra.mxu0 0.0
    %595 = vmatprep.subr.mxu0 0.0
    %596 = vmatpush1.msra.mxu0 0.0
    %597 = vmatprep.subr.mxu0 0.0
    %598 = vmatpush1.msra.mxu0 0.0
    %599 = vmatprep.subr.mxu0 0.0
    %600 = vmatpush1.msra.mxu0 0.0
    %601 = vmatprep.subr.mxu0 0.0
    %602 = vmatpush1.msra.mxu0 0.0
    %603 = vmatprep.subr.mxu0 0.0
    %604 = vmatpush1.msra.mxu0 0.0
    %605 = vmatprep.subr.mxu0 0.0
    %606 = vmatpush1.msra.mxu0 0.0
    %607 = vmatprep.subr.mxu0 0.0
    %608 = vmatpush1.msra.mxu0 0.0
    %609 = vmatprep.subr.mxu0 0.0
    %610 = vmatpush1.msra.mxu0 0.0
    %611 = vmatprep.subr.mxu0 0.0
    %612 = vmatpush1.msra.mxu0 0.0
    %613 = vmatprep.subr.mxu0 0.0
    %614 = vmatpush1.msra.mxu0 0.0
    %615 = vmatprep.mubr.f32.mxu0 0.0
    %616 = vmatmul.mubr.f32.gmra.mrb[0].mxu0 %v434
    %v617 = vpop.f32.mrb[0].mxu0
    %v618 = vadd.f32 %v550, %v617
    %v619 = vpop.f32.mrb[0].mxu0
    %620 = vdwg.mxu0
    %v621 = vlaneseq
    %v622 = vshrl.u32 %v621, 7
    %v623 = vsub.s32 0, %v622
    %v624 = vrot.slane %v467, %v623
    %v625 = vadd.f32 %v618, %v624
    %v626 = vmul.f32 %v468, %v469
    %v627 = vlaneseq
    %v628 = vshrl.u32 %v627, 7
    %v629 = vsub.s32 0, %v628
    %v630 = vrot.slane %v626, %v629
    %v631 = vadd.f32 %v625, %v630
    %632 = vst [vmem:[#allocation7] sm:$0xff] %v631
    // Predicated region
    $region18: #{tpu_custom_call.1} parent=1 // pred_check
      _
    $region19: #{tpu_custom_call.1} parent=1 // pred_check_branch
      %634 = sbr.rel (0) target = $region21
    $region20: #{tpu_custom_call.1} parent=1 // pred_region
      %s636 = ssub.s32 128, 128
      %637 = vsyncadd [#allocation4], %s636
      %s639 = sshll.u32 [#allocation7], 4
      %s640 = int_to_ptr.vmem [resolvable:$true] %s639
      %642 = dma.vmem_to_hbm [thread:$0]  %s640, 128, %s2, [#allocation4]
    $region21: #{tpu_custom_call.1} parent=1 // pred_fallthru
      _
    // Predicated region
    $region22: #{tpu_custom_call.1} parent=1 // pred_check
      _
    $region23: #{tpu_custom_call.1} parent=1 // pred_check_branch
      %644 = sbr.rel (0) target = $region25
    $region24: #{tpu_custom_call.1} parent=1 // pred_region
      %645 = dma.done [#allocation4], 128
    $region25: #{tpu_custom_call.1} parent=1 // pred_fallthru
      _
    %646 = vsyncpa [#allocation3], 1
    %647 = vsyncpa [#allocation6], 1
    %648 = vsyncpa [#allocation4], 1

</llo_original>
